<compile_context>
chip_gen: v6e
topology: v6e:2x2x1
jax: 0.10.0
libtpu: 0.0.40
codegen_flags: <defaults>
</compile_context>

<pallas_src>
import functools
import math

import jax
import jax.numpy as jnp
from jax.experimental import pallas as pl
from jax.experimental.pallas import tpu as pltpu

SIGMA_MIN = 0.01
SIGMA_MAX = 50.0
NF = 16                      # embedding_size
EMBED_DIM = 2 * NF           # 32
TEMB_DIM = 4 * NF            # 64
FOURIER_SCALE = 16.0

# Row layout of the packed parameter matrix (all offsets 8-sublane aligned).
W1_SIN_ROW = 0
W1_COS_ROW = NF                      # 16
W2_ROW = 2 * NF                      # 32
B1_ROW = W2_ROW + TEMB_DIM           # 96
B2_ROW = B1_ROW + 8                  # 104
MATS_ROWS = B2_ROW + 8               # 112


def time_embedding_kernel(*refs, use_param_t):
    if use_param_t:
        t_ref, pt_ref, freqs_ref, mats_ref, out_ref = refs
    else:
        t_ref, freqs_ref, mats_ref, out_ref = refs

    nb = t_ref.shape[0]
    w_freq = freqs_ref[0:1, :]          # (1, NF) = W * 2pi * log(smax/smin)
    w_phase = freqs_ref[1:2, :]         # (1, NF) = W * 2pi * log(smin)

    if use_param_t:
        # t is replaced by the single scalar sigmoid(param_t): compute the
        # Fourier features once on a (1, NF) row and broadcast over the batch
        # (EUP work drops from B rows to 1 row).
        tval = jax.nn.sigmoid(pt_ref[0, 0])
        row = tval * w_freq + w_phase                       # (1, NF)
        s = jnp.broadcast_to(jnp.sin(row), (nb, NF))
        c = jnp.broadcast_to(jnp.cos(row), (nb, NF))
    else:
        # x_proj = (log(smin) + t*log(smax/smin)) * W * 2pi  == t*w_freq + w_phase
        x_proj = t_ref[...] * w_freq + w_phase              # (nb, NF)
        s = jnp.sin(x_proj)
        c = jnp.cos(x_proj)

    # Static views into the packed parameter slab (zero-cost slices).
    w1_sin = mats_ref[W1_SIN_ROW:W1_SIN_ROW + NF, :]        # (16, 64)
    w1_cos = mats_ref[W1_COS_ROW:W1_COS_ROW + NF, :]        # (16, 64)
    w2 = mats_ref[W2_ROW:W2_ROW + TEMB_DIM, :]              # (64, 64)
    b1 = mats_ref[B1_ROW:B1_ROW + 1, :]                     # (1, 64)
    b2 = mats_ref[B2_ROW:B2_ROW + 1, :]                     # (1, 64)

    # Linear(32 -> 64) with the concat([sin, cos]) replaced by two K=16
    # matmuls (same single MXU pass each; no cross-lane shuffle).
    h = (jnp.dot(s, w1_sin, preferred_element_type=jnp.float32)
         + jnp.dot(c, w1_cos, preferred_element_type=jnp.float32)
         + b1)                                              # (nb, 64)

    # SiLU then Linear(64 -> 64).
    h = h * jax.nn.sigmoid(h)
    out = jnp.dot(h, w2, preferred_element_type=jnp.float32) + b2

    out_ref[...] = out.astype(out_ref.dtype)


def time_embedding(t, param_t, freqs, mats, use_param_t=False, block_b=None):
    """t: (B,) float array.  freqs/mats from pack_params().  Returns (B, 64) f32."""
    B = t.shape[0]
    t2 = t.reshape(B, 1).astype(jnp.float32)
    kernel = functools.partial(time_embedding_kernel, use_param_t=use_param_t)

    vmem = pltpu.MemorySpace.VMEM
    smem = pltpu.MemorySpace.SMEM

    args = [t2]
    if use_param_t:
        args.append(param_t)
    args += [freqs, mats]

    out_shape = jax.ShapeDtypeStruct((B, TEMB_DIM), jnp.float32)
    cost = pl.CostEstimate(
        flops=2 * B * (2 * NF * TEMB_DIM + TEMB_DIM * TEMB_DIM),
        transcendentals=B * (2 * NF + TEMB_DIM),
        bytes_accessed=4 * (B * (1 + TEMB_DIM) + 2 * NF
                            + MATS_ROWS * TEMB_DIM + 1),
    )

    use_grid = (block_b is not None and B > block_b
                and B % block_b == 0 and block_b % 8 == 0)

    if not use_grid:
        # Tiny batch: gridless call, single DMA per (packed) input.
        in_specs = [pl.BlockSpec(memory_space=vmem)]
        if use_param_t:
            in_specs.append(pl.BlockSpec(memory_space=smem))
        in_specs += [pl.BlockSpec(memory_space=vmem),
                     pl.BlockSpec(memory_space=vmem)]
        return pl.pallas_call(
            kernel,
            out_shape=out_shape,
            in_specs=in_specs,
            out_specs=pl.BlockSpec(memory_space=vmem),
            cost_estimate=cost,
        )(*args)

    # Large batch: 1-D grid over the batch; t/out are pipelined per tile, the
    # packed weights keep a constant block index (loaded once), and the batch
    # axis is marked parallel so the v7x megacore can split it.
    # TODO(synk): for very large B, a 128-lane (padded) output layout would
    # avoid masked vst stores; kept at 64 to match the module interface.
    in_specs = [pl.BlockSpec((block_b, 1), lambda i: (i, 0))]
    if use_param_t:
        in_specs.append(pl.BlockSpec(memory_space=smem))
    in_specs += [pl.BlockSpec((2, NF), lambda i: (0, 0)),
                 pl.BlockSpec((MATS_ROWS, TEMB_DIM), lambda i: (0, 0))]
    return pl.pallas_call(
        kernel,
        out_shape=out_shape,
        grid=(B // block_b,),
        in_specs=in_specs,
        out_specs=pl.BlockSpec((block_b, TEMB_DIM), lambda i: (i, 0)),
        compiler_params=pltpu.CompilerParams(
            dimension_semantics=("parallel",)),
        cost_estimate=cost,
    )(*args)


def init_params(key):
    """Deterministic synthetic parameter init (shapes per module __init__)."""
    k_gfp, k_w1, k_w2 = jax.random.split(key, 3)
    # GaussianFourierProjection: W ~ N(0,1) * scale, shape (nf,)
    w_gfp = jax.random.normal(k_gfp, (1, NF), jnp.float32) * FOURIER_SCALE
    # Linear(32, 64): weight (64, 32) in torch; stored transposed (32, 64).
    w1 = jax.random.normal(k_w1, (EMBED_DIM, TEMB_DIM), jnp.float32) \
        * (1.0 / math.sqrt(EMBED_DIM))
    b1 = jnp.zeros((1, TEMB_DIM), jnp.float32)
    # Linear(64, 64): weight (64, 64) in torch; stored transposed (64, 64).
    w2 = jax.random.normal(k_w2, (TEMB_DIM, TEMB_DIM), jnp.float32) \
        * (1.0 / math.sqrt(TEMB_DIM))
    b2 = jnp.zeros((1, TEMB_DIM), jnp.float32)
    param_t = jnp.zeros((1, 1), jnp.float32)
    return dict(param_t=param_t, w_gfp=w_gfp, w1=w1, b1=b1, w2=w2, b2=b2)


def pack_params(params):
    """Fold the sigma schedule / 2*pi constants into the Fourier weights and
    pack all matmul parameters into one 8-row-aligned VMEM slab."""
    two_pi = 2.0 * math.pi
    log_ratio = math.log(SIGMA_MAX / SIGMA_MIN)
    log_min = math.log(SIGMA_MIN)

    w_gfp = params["w_gfp"].reshape(1, NF).astype(jnp.float32)
    w_freq = w_gfp * jnp.float32(two_pi * log_ratio)
    w_phase = w_gfp * jnp.float32(two_pi * log_min)
    freqs = jnp.concatenate([w_freq, w_phase], axis=0)          # (2, 16)

    w1 = params["w1"].astype(jnp.float32)                       # (32, 64)
    w2 = params["w2"].astype(jnp.float32)                       # (64, 64)
    b1 = params["b1"].reshape(1, TEMB_DIM).astype(jnp.float32)
    b2 = params["b2"].reshape(1, TEMB_DIM).astype(jnp.float32)
    pad7 = jnp.zeros((7, TEMB_DIM), jnp.float32)
    mats = jnp.concatenate(
        [w1[:NF], w1[NF:], w2, b1, pad7, b2, pad7], axis=0)     # (112, 64)
    assert mats.shape == (MATS_ROWS, TEMB_DIM)
    return freqs, mats


def time_embedding_ref(t, params, use_param_t=False):
    """Pure-JAX reference that mirrors the PyTorch forward op-for-op."""
    t = t.astype(jnp.float32)
    if use_param_t:
        t = t * 0.0 + jax.nn.sigmoid(params["param_t"][0, 0])
    sigma = SIGMA_MIN * (SIGMA_MAX / SIGMA_MIN) ** t
    x = jnp.log(sigma)[:, None]                          # (B, 1)
    x_proj = x * params["w_gfp"] * (2.0 * math.pi)       # (B, 16)
    temb0 = jnp.concatenate([jnp.sin(x_proj), jnp.cos(x_proj)], axis=-1)
    h = temb0 @ params["w1"] + params["b1"]
    h = h * jax.nn.sigmoid(h)
    return h @ params["w2"] + params["b2"]


if __name__ == "__main__":
    key = jax.random.PRNGKey(0)
    k_t, k_p, k_tb = jax.random.split(key, 3)

    params = init_params(k_p)
    freqs, mats = pack_params(params)

    # The kernel uses the algebraically-exact affine form of log(sigma) with
    # constants folded into the Fourier weights; with scale=16 the sin/cos
    # arguments reach O(1e3), so fp32 rounding differences vs. the pow/log
    # reference chain can reach ~1e-3 at the output.  Tolerances reflect that.
    ATOL = 2e-3
    RTOL = 2e-3

    # --- small batch, gridless (matches the module's typical usage) ---------
    B = 8
    t = jax.random.uniform(k_t, (B,), jnp.float32)       # diffusion times in [0, 1)

    out = jax.block_until_ready(
        time_embedding(t, params["param_t"], freqs, mats, use_param_t=False))
    ref = time_embedding_ref(t, params, use_param_t=False)
    assert out.shape == (B, TEMB_DIM)
    assert jnp.allclose(out, ref, atol=ATOL, rtol=RTOL), \
        float(jnp.max(jnp.abs(out - ref)))

    # use_param_t path (scalar sigmoid(param_t) broadcast over the batch)
    out_p = jax.block_until_ready(
        time_embedding(t, params["param_t"], freqs, mats, use_param_t=True))
    ref_p = time_embedding_ref(t, params, use_param_t=True)
    assert jnp.allclose(out_p, ref_p, atol=ATOL, rtol=RTOL), \
        float(jnp.max(jnp.abs(out_p - ref_p)))

    # --- larger batch through the pipelined batch grid ----------------------
    B_big = 256
    t_big = jax.random.uniform(k_tb, (B_big,), jnp.float32)
    out_big = jax.block_until_ready(
        time_embedding(t_big, params["param_t"], freqs, mats,
                       use_param_t=False, block_b=64))
    ref_big = time_embedding_ref(t_big, params, use_param_t=False)
    assert out_big.shape == (B_big, TEMB_DIM)
    assert jnp.allclose(out_big, ref_big, atol=ATOL, rtol=RTOL), \
        float(jnp.max(jnp.abs(out_big - ref_big)))

    print("KERNEL_OK")
</pallas_src>

<mosaic_0001>
module attributes {stable_mosaic.version = 11 : i64} {
  func.func @time_embedding_kernel(%arg0: memref<8x1xf32, #tpu.memory_space<vmem>>, %arg1: memref<2x16xf32, #tpu.memory_space<vmem>>, %arg2: memref<112x64xf32, #tpu.memory_space<vmem>>, %arg3: memref<8x64xf32, #tpu.memory_space<vmem>>) attributes {dimension_semantics = [], scalar_prefetch = 0 : i64, scratch_operands = 0 : i64, tpu.core_type = #tpu.core_type<tc>} {
    %c0 = arith.constant 0 : index
    %c0_0 = arith.constant 0 : index
    %0 = vector.load %arg1[%c0, %c0_0] : memref<2x16xf32, #tpu.memory_space<vmem>>, vector<1x16xf32>
    %c1 = arith.constant 1 : index
    %c0_1 = arith.constant 0 : index
    %1 = vector.load %arg1[%c1, %c0_1] : memref<2x16xf32, #tpu.memory_space<vmem>>, vector<1x16xf32>
    %c0_2 = arith.constant 0 : index
    %c0_3 = arith.constant 0 : index
    %2 = vector.load %arg0[%c0_2, %c0_3] : memref<8x1xf32, #tpu.memory_space<vmem>>, vector<8x1xf32>
    %3 = vector.broadcast %2 : vector<8x1xf32> to vector<8x16xf32>
    %4 = vector.broadcast %0 : vector<1x16xf32> to vector<8x16xf32>
    %5 = arith.mulf %3, %4 : vector<8x16xf32>
    %6 = vector.broadcast %1 : vector<1x16xf32> to vector<8x16xf32>
    %7 = arith.addf %5, %6 : vector<8x16xf32>
    %8 = math.sin %7 : vector<8x16xf32>
    %9 = math.cos %7 : vector<8x16xf32>
    %c0_4 = arith.constant 0 : index
    %c0_5 = arith.constant 0 : index
    %10 = vector.load %arg2[%c0_4, %c0_5] : memref<112x64xf32, #tpu.memory_space<vmem>>, vector<16x64xf32>
    %c16 = arith.constant 16 : index
    %c0_6 = arith.constant 0 : index
    %11 = vector.load %arg2[%c16, %c0_6] : memref<112x64xf32, #tpu.memory_space<vmem>>, vector<16x64xf32>
    %c32 = arith.constant 32 : index
    %c0_7 = arith.constant 0 : index
    %12 = vector.load %arg2[%c32, %c0_7] : memref<112x64xf32, #tpu.memory_space<vmem>>, vector<64x64xf32>
    %c96 = arith.constant 96 : index
    %c0_8 = arith.constant 0 : index
    %13 = vector.load %arg2[%c96, %c0_8] : memref<112x64xf32, #tpu.memory_space<vmem>>, vector<1x64xf32>
    %c104 = arith.constant 104 : index
    %c0_9 = arith.constant 0 : index
    %14 = vector.load %arg2[%c104, %c0_9] : memref<112x64xf32, #tpu.memory_space<vmem>>, vector<1x64xf32>
    %cst = arith.constant dense<0.000000e+00> : vector<8x64xf32>
    %15 = tpu.matmul %8, %10, %cst {dimension_numbers = #tpu.dot_dimension_numbers<[1], [0], [0], [1], [0, 0, 1, 1], [], []>} : vector<8x16xf32>, vector<16x64xf32>, vector<8x64xf32> -> vector<8x64xf32>
    %cst_10 = arith.constant dense<0.000000e+00> : vector<8x64xf32>
    %16 = tpu.matmul %9, %11, %cst_10 {dimension_numbers = #tpu.dot_dimension_numbers<[1], [0], [0], [1], [0, 0, 1, 1], [], []>} : vector<8x16xf32>, vector<16x64xf32>, vector<8x64xf32> -> vector<8x64xf32>
    %17 = arith.addf %15, %16 : vector<8x64xf32>
    %18 = vector.broadcast %13 : vector<1x64xf32> to vector<8x64xf32>
    %19 = arith.addf %17, %18 : vector<8x64xf32>
    %20 = arith.negf %19 : vector<8x64xf32>
    %21 = math.exp %20 : vector<8x64xf32>
    %cst_11 = arith.constant 1.000000e+00 : f32
    %22 = vector.broadcast %cst_11 : f32 to vector<8x64xf32>
    %23 = arith.addf %22, %21 : vector<8x64xf32>
    %24 = arith.divf %22, %23 : vector<8x64xf32>
    %25 = arith.mulf %19, %24 : vector<8x64xf32>
    %cst_12 = arith.constant dense<0.000000e+00> : vector<8x64xf32>
    %26 = tpu.matmul %25, %12, %cst_12 {dimension_numbers = #tpu.dot_dimension_numbers<[1], [0], [0], [1], [0, 0, 1, 1], [], []>} : vector<8x64xf32>, vector<64x64xf32>, vector<8x64xf32> -> vector<8x64xf32>
    %27 = vector.broadcast %14 : vector<1x64xf32> to vector<8x64xf32>
    %28 = arith.addf %26, %27 : vector<8x64xf32>
    %c0_13 = arith.constant 0 : index
    %c0_14 = arith.constant 0 : index
    %29 = vector.load %arg3[%c0_13, %c0_14] : memref<8x64xf32, #tpu.memory_space<vmem>>, vector<8x64xf32>
    tpu.vector_store %arg3[%c0_13, %c0_14], %28 {strides = array<i32>} : memref<8x64xf32, #tpu.memory_space<vmem>>, vector<8x64xf32>,
    return
  }
}

</mosaic_0001>

<llo_original>
// kernel: tpu_custom_call.1
$region0: #{tpu_custom_call.1}
  #allocation0 [shape = 'u32[]', space=smem, size = 0x4, offset = 0x4, fixed_abs, tag = 'smem constant byte address 0x4 - core index']
  #allocation1 [shape = 'u32[144,128]{1,0:T(1,128)}', space=vmem, size = 0x12000, scoped, tag = 'internal scratch']
  %s0 = inlined_call_operand.vmem [shape: f32[8,1], index: 0, kind: input, shape index: {}]
  %s1 = inlined_call_operand.vmem [shape: f32[2,16], index: 1, kind: input, shape index: {}]
  %s2 = inlined_call_operand.vmem [shape: f32[112,64], index: 2, kind: input, shape index: {}]
  %s3 = inlined_call_operand.hbm [shape: f32[8,64], index: 3, kind: output, shape index: {}]
  %s4 = sld [smem:[#allocation0]]
  $region22: #{tpu_custom_call.1} parent=0
    _
  %s6 = ssub.s32 1, %s4
  %s7 = scalar_select 0, %s6, %s4
  $region1: #{tpu_custom_call.1} parent=0
    #allocation2 [shape = 'u8[4096]{0}', space=vmem, size = 0x1000, scoped, tag = 'output window, operand 0, single buffered']
    #allocation3 [shape = 's32[1]{0}', space=sflag, size = 0x4, scoped, tag = 'scoped memory for tpu_custom_call.1']
    %8 = vsyncpa [#allocation3], 0
    // Predicated region
    $region2: #{tpu_custom_call.1} parent=1 // pred_check
      _
    $region3: #{tpu_custom_call.1} parent=1 // pred_check_branch
      %10 = sbr.rel (0) target = $region5
    $region4: #{tpu_custom_call.1} parent=1 // pred_region
      _
    $region5: #{tpu_custom_call.1} parent=1 // pred_fallthru
      _
    // Predicated region
    $region6: #{tpu_custom_call.1} parent=1 // pred_check
      _
    $region7: #{tpu_custom_call.1} parent=1 // pred_check_branch
      %12 = sbr.rel (0) target = $region9
    $region8: #{tpu_custom_call.1} parent=1 // pred_region
      _
    $region9: #{tpu_custom_call.1} parent=1 // pred_fallthru
      _
    // Predicated region
    $region10: #{tpu_custom_call.1} parent=1 // pred_check
      _
    $region11: #{tpu_custom_call.1} parent=1 // pred_check_branch
      %14 = sbr.rel (0) target = $region13
    $region12: #{tpu_custom_call.1} parent=1 // pred_region
      _
    $region13: #{tpu_custom_call.1} parent=1 // pred_fallthru
      _
    %v15 = vld [vmem:[%s1] sm:$0x1]
    %v16 = vld [vmem:[%s1 + $0x1] sm:$0x1]
    %v17 = vld [vmem:[%s0] sm:$0xff]
    %19 = vset.pattern.permute.xlu0 0
    %20 = vperm.xlu0 %19, %v17
    %v21 = vpop.permute.xlu0 %20
    %v23 = vlaneseq
    %v24 = vshrl.u32 %v23, 7
    %v25 = vsub.s32 0, %v24
    %v26 = vrot.slane %v15, %v25
    %v27 = vmul.f32 %v21, %v26
    %v28 = vlaneseq
    %v29 = vshrl.u32 %v28, 7
    %v30 = vsub.s32 0, %v29
    %v31 = vrot.slane %v16, %v30
    %v32 = vadd.f32 %v27, %v31
    %v33 = vand.u32 2147483647, %v32
    %vm34 = vcmp.le.f32.partialorder %v33, 0.7853982
    %vm35 = vcmp.lt.s32.totalorder %v32, 0
    %v36 = vand.u32 %v32, 2139095040
    %v37 = vshrl.u32 %v36, 23
    %v38 = vsub.s32 %v37, 127
    %v39 = vand.u32 2147483647, %v32
    %v40 = vand.u32 %v39, 8388607
    %v41 = vor.u32 %v40, 8388608
    %v42 = vsub.s32 0, %v41
    %v43 = vadd.s32 %v38, 1
    %vm44 = vcmp.gt.s32.totalorder %v43, 0
    %v45 = vsel %vm44, %v43, 0
    %v46 = vshrl.u32 %v45, 5
    %v47 = vand.u32 %v45, 31
    %v48 = vsub.s32 32, %v47
    %v49 = vshrl.u32 683565275, %v48
    %v50 = vshll.u32 683565275, %v47
    %v51 = vshrl.u32 2475754826, %v48
    %v52 = vor.u32 %v50, %v51
    %v53 = vshll.u32 2475754826, %v47
    %v54 = vshrl.u32 2131351028, %v48
    %v55 = vor.u32 %v53, %v54
    %v56 = vshll.u32 2131351028, %v47
    %v57 = vshrl.u32 2102212464, %v48
    %v58 = vor.u32 %v56, %v57
    %v59 = vshll.u32 2102212464, %v47
    %v60 = vshrl.u32 920167782, %v48
    %v61 = vor.u32 %v59, %v60
    %v62 = vshll.u32 920167782, %v47
    %v63 = vshrl.u32 1326507024, %v48
    %v64 = vor.u32 %v62, %v63
    %vm65 = vcmp.lt.s32.totalorder %v46, 1
    %vm66 = vcmp.lt.s32.totalorder %v46, 2
    %vm67 = vcmp.lt.s32.totalorder %v46, 3
    %vm68 = vcmp.lt.s32.totalorder %v46, 4
    %v69 = vsel %vm65, %v49, %v52
    %v70 = vsel %vm68, %v58, 2102212464
    %v71 = vsel %vm67, %v55, %v70
    %v72 = vsel %vm66, %v69, %v71
    %v73 = vsel %vm65, %v52, %v55
    %v74 = vsel %vm68, %v61, 920167782
    %v75 = vsel %vm67, %v58, %v74
    %v76 = vsel %vm66, %v73, %v75
    %v77 = vsel %vm65, %v55, %v58
    %v78 = vsel %vm68, %v64, 1326507024
    %v79 = vsel %vm67, %v61, %v78
    %v80 = vsel %vm66, %v77, %v79
    %v81 = vshll.u32 %v41, 8
    %v82 = vmul.u32.u64.compose %v81, %v80
    %v83 = vextract.low.u32 %v82
    %v84 = vextract.high.u32 %v82
    %v85 = vmul.u32.u64.compose %v81, %v76
    %v86 = vextract.low.u32 %v85
    %v87 = vextract.high.u32 %v85
    %v88 = vmul.u32 %v81, %v72
    %v89 = vadd.s32 %v84, %v86
    %vm90 = vc.u32 %v84, %v86
    %v91 = vadd.s32 %v87, 1
    %v92 = vsel %vm90, %v91, %v87
    %v93 = vadd.s32 %v88, %v92
    %v94 = vadd.s32 %v93, 536870912
    %v95 = vshrl.u32 %v94, 30
    %v96 = vshll.u32 %v95, 30
    %v97 = vsub.s32 %v93, %v96
    %vm98 = vcmp.lt.s32.totalorder %v97, 0
    %v99 = vsub.s32 0, %v97
    %v100 = vsel %vm98, %v99, %v97
    %v101 = vclz %v100
    %v102 = vsub.s32 %v101, 2
    %vm103 = vcmp.gt.s32.totalorder 0, %v102
    %v104 = vsel %vm103, 0, %v102
    %v105 = vsub.s32 32, %v104
    %v106 = vshll.u32 %v97, %v104
    %v107 = vshrl.u32 %v89, %v105
    %v108 = vor.u32 %v106, %v107
    %v109 = vsub.s32 4294967266, %v104
    %v110 = vadd.s32 %v109, 127
    %v111 = vshll.u32 %v110, 23
    %v112 = vor.u32 4788187, %v111
    %v113 = vand.u32 2147483647, %v112
    %v115 = vcvt.s32.f32 %v108
    %v116 = vmul.f32 %v115, %v113
    %v117 = vxor.u32 %v116, 2147483648
    %v118 = vsel %vm35, %v117, %v116
    %v119 = vsub.s32 4, %v95
    %v120 = vsel %vm35, %v119, %v95
    %v121 = vsel %vm34, %v32, %v118
    %v122 = vsel %vm34, 0, %v120
    %v123 = vcosq.f32.pop %v121
    %v124 = vsinq.f32.pop %v121
    %vm125 = vweird.f32 %v32
    %v126 = vadd.s32 %v122, 3
    %v127 = vand.u32 %v126, 3
    %vm128 = vcmp.lt.s32.totalorder %v127, 2
    %vm129 = vcmp.eq.s32.totalorder %v127, 0
    %v130 = vxor.u32 %v124, 2147483648
    %v131 = vsel %vm129, %v123, %v130
    %vm132 = vcmp.eq.s32.totalorder %v127, 2
    %v133 = vxor.u32 %v123, 2147483648
    %v134 = vsel %vm132, %v133, %v124
    %v135 = vsel %vm128, %v131, %v134
    %v136 = vsel %vm125, nan, %v135
    %v137 = vand.u32 2147483647, %v32
    %vm138 = vcmp.le.f32.partialorder %v137, 0.7853982
    %vm139 = vcmp.lt.s32.totalorder %v32, 0
    %v140 = vand.u32 %v32, 2139095040
    %v141 = vshrl.u32 %v140, 23
    %v142 = vsub.s32 %v141, 127
    %v143 = vand.u32 2147483647, %v32
    %v144 = vand.u32 %v143, 8388607
    %v145 = vor.u32 %v144, 8388608
    %v146 = vsub.s32 0, %v145
    %v147 = vadd.s32 %v142, 1
    %vm148 = vcmp.gt.s32.totalorder %v147, 0
    %v149 = vsel %vm148, %v147, 0
    %v150 = vshrl.u32 %v149, 5
    %v151 = vand.u32 %v149, 31
    %v152 = vsub.s32 32, %v151
    %v153 = vshrl.u32 683565275, %v152
    %v154 = vshll.u32 683565275, %v151
    %v155 = vshrl.u32 2475754826, %v152
    %v156 = vor.u32 %v154, %v155
    %v157 = vshll.u32 2475754826, %v151
    %v158 = vshrl.u32 2131351028, %v152
    %v159 = vor.u32 %v157, %v158
    %v160 = vshll.u32 2131351028, %v151
    %v161 = vshrl.u32 2102212464, %v152
    %v162 = vor.u32 %v160, %v161
    %v163 = vshll.u32 2102212464, %v151
    %v164 = vshrl.u32 920167782, %v152
    %v165 = vor.u32 %v163, %v164
    %v166 = vshll.u32 920167782, %v151
    %v167 = vshrl.u32 1326507024, %v152
    %v168 = vor.u32 %v166, %v167
    %vm169 = vcmp.lt.s32.totalorder %v150, 1
    %vm170 = vcmp.lt.s32.totalorder %v150, 2
    %vm171 = vcmp.lt.s32.totalorder %v150, 3
    %vm172 = vcmp.lt.s32.totalorder %v150, 4
    %v173 = vsel %vm169, %v153, %v156
    %v174 = vsel %vm172, %v162, 2102212464
    %v175 = vsel %vm171, %v159, %v174
    %v176 = vsel %vm170, %v173, %v175
    %v177 = vsel %vm169, %v156, %v159
    %v178 = vsel %vm172, %v165, 920167782
    %v179 = vsel %vm171, %v162, %v178
    %v180 = vsel %vm170, %v177, %v179
    %v181 = vsel %vm169, %v159, %v162
    %v182 = vsel %vm172, %v168, 1326507024
    %v183 = vsel %vm171, %v165, %v182
    %v184 = vsel %vm170, %v181, %v183
    %v185 = vshll.u32 %v145, 8
    %v186 = vmul.u32.u64.compose %v185, %v184
    %v187 = vextract.low.u32 %v186
    %v188 = vextract.high.u32 %v186
    %v189 = vmul.u32.u64.compose %v185, %v180
    %v190 = vextract.low.u32 %v189
    %v191 = vextract.high.u32 %v189
    %v192 = vmul.u32 %v185, %v176
    %v193 = vadd.s32 %v188, %v190
    %vm194 = vc.u32 %v188, %v190
    %v195 = vadd.s32 %v191, 1
    %v196 = vsel %vm194, %v195, %v191
    %v197 = vadd.s32 %v192, %v196
    %v198 = vadd.s32 %v197, 536870912
    %v199 = vshrl.u32 %v198, 30
    %v200 = vshll.u32 %v199, 30
    %v201 = vsub.s32 %v197, %v200
    %vm202 = vcmp.lt.s32.totalorder %v201, 0
    %v203 = vsub.s32 0, %v201
    %v204 = vsel %vm202, %v203, %v201
    %v205 = vclz %v204
    %v206 = vsub.s32 %v205, 2
    %vm207 = vcmp.gt.s32.totalorder 0, %v206
    %v208 = vsel %vm207, 0, %v206
    %v209 = vsub.s32 32, %v208
    %v210 = vshll.u32 %v201, %v208
    %v211 = vshrl.u32 %v193, %v209
    %v212 = vor.u32 %v210, %v211
    %v213 = vsub.s32 4294967266, %v208
    %v214 = vadd.s32 %v213, 127
    %v215 = vshll.u32 %v214, 23
    %v216 = vor.u32 4788187, %v215
    %v217 = vand.u32 2147483647, %v216
    %v219 = vcvt.s32.f32 %v212
    %v220 = vmul.f32 %v219, %v217
    %v221 = vxor.u32 %v220, 2147483648
    %v222 = vsel %vm139, %v221, %v220
    %v223 = vsub.s32 4, %v199
    %v224 = vsel %vm139, %v223, %v199
    %v225 = vsel %vm138, %v32, %v222
    %v226 = vsel %vm138, 0, %v224
    %v227 = vcosq.f32.pop %v225
    %v228 = vsinq.f32.pop %v225
    %vm229 = vweird.f32 %v32
    %v230 = vand.u32 %v226, 3
    %vm231 = vcmp.lt.s32.totalorder %v230, 2
    %vm232 = vcmp.eq.s32.totalorder %v230, 0
    %v233 = vxor.u32 %v228, 2147483648
    %v234 = vsel %vm232, %v227, %v233
    %vm235 = vcmp.eq.s32.totalorder %v230, 2
    %v236 = vxor.u32 %v227, 2147483648
    %v237 = vsel %vm235, %v236, %v228
    %v238 = vsel %vm231, %v234, %v237
    %v239 = vsel %vm229, nan, %v238
    %v240 = vld [vmem:[%s2] sm:$0xff]
    %v241 = vld [vmem:[%s2 + $0x8] sm:$0xff]
    %v242 = vld [vmem:[%s2 + $0x10] sm:$0xff]
    %v243 = vld [vmem:[%s2 + $0x18] sm:$0xff]
    %v244 = vld [vmem:[%s2 + $0x20] sm:$0xff]
    %v245 = vld [vmem:[%s2 + $0x28] sm:$0xff]
    %v246 = vld [vmem:[%s2 + $0x30] sm:$0xff]
    %v247 = vld [vmem:[%s2 + $0x38] sm:$0xff]
    %v248 = vld [vmem:[%s2 + $0x40] sm:$0xff]
    %v249 = vld [vmem:[%s2 + $0x48] sm:$0xff]
    %v250 = vld [vmem:[%s2 + $0x50] sm:$0xff]
    %v251 = vld [vmem:[%s2 + $0x58] sm:$0xff]
    %v252 = vld [vmem:[%s2 + $0x60] sm:$0x1]
    %v253 = vld [vmem:[%s2 + $0x68] sm:$0x1]
    %vm254 = vcmask 130048
    %v256 = vsel %vm254, %v239, 0
    %258 = vmatprep.subr.mxu0 0.0
    %259 = vmatpush1.msra.mxu0 0.0
    %260 = vmatprep.subr.mxu0 0.0
    %261 = vmatpush1.msra.mxu0 0.0
    %262 = vmatprep.subr.mxu0 0.0
    %263 = vmatpush1.msra.mxu0 0.0
    %264 = vmatprep.subr.mxu0 0.0
    %265 = vmatpush1.msra.mxu0 0.0
    %266 = vmatprep.subr.mxu0 0.0
    %267 = vmatpush1.msra.mxu0 0.0
    %268 = vmatprep.subr.mxu0 0.0
    %269 = vmatpush1.msra.mxu0 0.0
    %270 = vmatprep.subr.mxu0 0.0
    %271 = vmatpush1.msra.mxu0 0.0
    %272 = vmatprep.subr.mxu0 0.0
    %273 = vmatpush1.msra.mxu0 0.0
    %274 = vmatprep.subr.mxu0 0.0
    %275 = vmatpush1.msra.mxu0 0.0
    %276 = vmatprep.subr.mxu0 0.0
    %277 = vmatpush1.msra.mxu0 0.0
    %278 = vmatprep.subr.mxu0 0.0
    %279 = vmatpush1.msra.mxu0 0.0
    %280 = vmatprep.subr.mxu0 0.0
    %281 = vmatpush1.msra.mxu0 0.0
    %282 = vmatprep.subr.mxu0 0.0
    %283 = vmatpush1.msra.mxu0 0.0
    %284 = vmatprep.subr.mxu0 0.0
    %285 = vmatpush1.msra.mxu0 0.0
    %286 = vmatprep.subr.mxu0 0.0
    %287 = vmatpush1.msra.mxu0 %v243
    %288 = vmatprep.subr.mxu0 0.0
    %289 = vmatpush1.msra.mxu0 %v242
    %290 = vmatprep.subr.mxu0 0.0
    %291 = vmatpush2.msra.mxu0 0.0
    %292 = vmatprep.subr.mxu0 0.0
    %293 = vmatpush2.msra.mxu0 0.0
    %294 = vmatprep.subr.mxu0 0.0
    %295 = vmatpush2.msra.mxu0 0.0
    %296 = vmatprep.subr.mxu0 0.0
    %297 = vmatpush2.msra.mxu0 0.0
    %298 = vmatprep.subr.mxu0 0.0
    %299 = vmatpush2.msra.mxu0 0.0
    %300 = vmatprep.subr.mxu0 0.0
    %301 = vmatpush2.msra.mxu0 0.0
    %302 = vmatprep.subr.mxu0 0.0
    %303 = vmatpush2.msra.mxu0 0.0
    %304 = vmatprep.subr.mxu0 0.0
    %305 = vmatpush2.msra.mxu0 0.0
    %306 = vmatprep.subr.mxu0 0.0
    %307 = vmatpush2.msra.mxu0 0.0
    %308 = vmatprep.subr.mxu0 0.0
    %309 = vmatpush2.msra.mxu0 0.0
    %310 = vmatprep.subr.mxu0 0.0
    %311 = vmatpush2.msra.mxu0 0.0
    %312 = vmatprep.subr.mxu0 0.0
    %313 = vmatpush2.msra.mxu0 0.0
    %314 = vmatprep.subr.mxu0 0.0
    %315 = vmatpush2.msra.mxu0 0.0
    %316 = vmatprep.subr.mxu0 0.0
    %317 = vmatpush2.msra.mxu0 0.0
    %318 = vmatprep.subr.mxu0 0.0
    %319 = vmatpush2.msra.mxu0 0.0
    %320 = vmatprep.subr.mxu0 0.0
    %321 = vmatpush2.msra.mxu0 0.0
    %322 = vmatprep.mubr.f32.mxu0 0.0
    %323 = vmatmul.mubr.f32.gmra.mxu0 %v256
    %v324 = vpop.f32.mrf.mxu0
    %v325 = vadd.f32 0.0, %v324
    %v326 = vpop.f32.mrf.mxu0
    %327 = vdwg.mxu0
    %v329 = vsel %vm254, %v136, 0
    %331 = vmatprep.subr.mxu0 0.0
    %332 = vmatpush1.msra.mxu0 0.0
    %333 = vmatprep.subr.mxu0 0.0
    %334 = vmatpush1.msra.mxu0 0.0
    %335 = vmatprep.subr.mxu0 0.0
    %336 = vmatpush1.msra.mxu0 0.0
    %337 = vmatprep.subr.mxu0 0.0
    %338 = vmatpush1.msra.mxu0 0.0
    %339 = vmatprep.subr.mxu0 0.0
    %340 = vmatpush1.msra.mxu0 0.0
    %341 = vmatprep.subr.mxu0 0.0
    %342 = vmatpush1.msra.mxu0 0.0
    %343 = vmatprep.subr.mxu0 0.0
    %344 = vmatpush1.msra.mxu0 0.0
    %345 = vmatprep.subr.mxu0 0.0
    %346 = vmatpush1.msra.mxu0 0.0
    %347 = vmatprep.subr.mxu0 0.0
    %348 = vmatpush1.msra.mxu0 0.0
    %349 = vmatprep.subr.mxu0 0.0
    %350 = vmatpush1.msra.mxu0 0.0
    %351 = vmatprep.subr.mxu0 0.0
    %352 = vmatpush1.msra.mxu0 0.0
    %353 = vmatprep.subr.mxu0 0.0
    %354 = vmatpush1.msra.mxu0 0.0
    %355 = vmatprep.subr.mxu0 0.0
    %356 = vmatpush1.msra.mxu0 0.0
    %357 = vmatprep.subr.mxu0 0.0
    %358 = vmatpush1.msra.mxu0 0.0
    %359 = vmatprep.subr.mxu0 0.0
    %360 = vmatpush1.msra.mxu0 %v241
    %361 = vmatprep.subr.mxu0 0.0
    %362 = vmatpush1.msra.mxu0 %v240
    %363 = vmatprep.subr.mxu0 0.0
    %364 = vmatpush2.msra.mxu0 0.0
    %365 = vmatprep.subr.mxu0 0.0
    %366 = vmatpush2.msra.mxu0 0.0
    %367 = vmatprep.subr.mxu0 0.0
    %368 = vmatpush2.msra.mxu0 0.0
    %369 = vmatprep.subr.mxu0 0.0
    %370 = vmatpush2.msra.mxu0 0.0
    %371 = vmatprep.subr.mxu0 0.0
    %372 = vmatpush2.msra.mxu0 0.0
    %373 = vmatprep.subr.mxu0 0.0
    %374 = vmatpush2.msra.mxu0 0.0
    %375 = vmatprep.subr.mxu0 0.0
    %376 = vmatpush2.msra.mxu0 0.0
    %377 = vmatprep.subr.mxu0 0.0
    %378 = vmatpush2.msra.mxu0 0.0
    %379 = vmatprep.subr.mxu0 0.0
    %380 = vmatpush2.msra.mxu0 0.0
    %381 = vmatprep.subr.mxu0 0.0
    %382 = vmatpush2.msra.mxu0 0.0
    %383 = vmatprep.subr.mxu0 0.0
    %384 = vmatpush2.msra.mxu0 0.0
    %385 = vmatprep.subr.mxu0 0.0
    %386 = vmatpush2.msra.mxu0 0.0
    %387 = vmatprep.subr.mxu0 0.0
    %388 = vmatpush2.msra.mxu0 0.0
    %389 = vmatprep.subr.mxu0 0.0
    %390 = vmatpush2.msra.mxu0 0.0
    %391 = vmatprep.subr.mxu0 0.0
    %392 = vmatpush2.msra.mxu0 0.0
    %393 = vmatprep.subr.mxu0 0.0
    %394 = vmatpush2.msra.mxu0 0.0
    %395 = vmatprep.mubr.f32.mxu0 0.0
    %396 = vmatmul.mubr.f32.gmra.mxu0 %v329
    %v397 = vpop.f32.mrf.mxu0
    %v398 = vadd.f32 %v325, %v397
    %v399 = vpop.f32.mrf.mxu0
    %400 = vdwg.mxu0
    %v401 = vlaneseq
    %v402 = vshrl.u32 %v401, 7
    %v403 = vsub.s32 0, %v402
    %v404 = vrot.slane %v252, %v403
    %v405 = vadd.f32 %v398, %v404
    %v406 = vxor.u32 %v405, 2147483648
    %v407 = vmul.f32 %v406, 1.442695
    %v408 = vpow.pop %v407
    %v409 = vadd.f32 %v408, 1.0
    %v410 = vrcp.pop %v409
    %v411 = vmul.f32 1.0, %v410
    %v412 = vmul.f32 %v405, %v411
    %v413 = vlaneseq
    %v414 = vshrl.u32 %v413, 7
    %v415 = vsub.s32 0, %v414
    %v416 = vrot.slane %v253, %v415
    %vm417 = vcmask 523264
    %v419 = vsel %vm417, %v412, 0
    %421 = vmatprep.subr.mxu0 0.0
    %422 = vmatpush1.msra.mxu0 0.0
    %423 = vmatprep.subr.mxu0 0.0
    %424 = vmatpush1.msra.mxu0 0.0
    %425 = vmatprep.subr.mxu0 0.0
    %426 = vmatpush1.msra.mxu0 0.0
    %427 = vmatprep.subr.mxu0 0.0
    %428 = vmatpush1.msra.mxu0 0.0
    %429 = vmatprep.subr.mxu0 0.0
    %430 = vmatpush1.msra.mxu0 0.0
    %431 = vmatprep.subr.mxu0 0.0
    %432 = vmatpush1.msra.mxu0 0.0
    %433 = vmatprep.subr.mxu0 0.0
    %434 = vmatpush1.msra.mxu0 0.0
    %435 = vmatprep.subr.mxu0 0.0
    %436 = vmatpush1.msra.mxu0 0.0
    %437 = vmatprep.subr.mxu0 0.0
    %438 = vmatpush1.msra.mxu0 %v251
    %439 = vmatprep.subr.mxu0 0.0
    %440 = vmatpush1.msra.mxu0 %v250
    %441 = vmatprep.subr.mxu0 0.0
    %442 = vmatpush1.msra.mxu0 %v249
    %443 = vmatprep.subr.mxu0 0.0
    %444 = vmatpush1.msra.mxu0 %v248
    %445 = vmatprep.subr.mxu0 0.0
    %446 = vmatpush1.msra.mxu0 %v247
    %447 = vmatprep.subr.mxu0 0.0
    %448 = vmatpush1.msra.mxu0 %v246
    %449 = vmatprep.subr.mxu0 0.0
    %450 = vmatpush1.msra.mxu0 %v245
    %451 = vmatprep.subr.mxu0 0.0
    %452 = vmatpush1.msra.mxu0 %v244
    %453 = vmatprep.subr.mxu0 0.0
    %454 = vmatpush2.msra.mxu0 0.0
    %455 = vmatprep.subr.mxu0 0.0
    %456 = vmatpush2.msra.mxu0 0.0
    %457 = vmatprep.subr.mxu0 0.0
    %458 = vmatpush2.msra.mxu0 0.0
    %459 = vmatprep.subr.mxu0 0.0
    %460 = vmatpush2.msra.mxu0 0.0
    %461 = vmatprep.subr.mxu0 0.0
    %462 = vmatpush2.msra.mxu0 0.0
    %463 = vmatprep.subr.mxu0 0.0
    %464 = vmatpush2.msra.mxu0 0.0
    %465 = vmatprep.subr.mxu0 0.0
    %466 = vmatpush2.msra.mxu0 0.0
    %467 = vmatprep.subr.mxu0 0.0
    %468 = vmatpush2.msra.mxu0 0.0
    %469 = vmatprep.subr.mxu0 0.0
    %470 = vmatpush2.msra.mxu0 0.0
    %471 = vmatprep.subr.mxu0 0.0
    %472 = vmatpush2.msra.mxu0 0.0
    %473 = vmatprep.subr.mxu0 0.0
    %474 = vmatpush2.msra.mxu0 0.0
    %475 = vmatprep.subr.mxu0 0.0
    %476 = vmatpush2.msra.mxu0 0.0
    %477 = vmatprep.subr.mxu0 0.0
    %478 = vmatpush2.msra.mxu0 0.0
    %479 = vmatprep.subr.mxu0 0.0
    %480 = vmatpush2.msra.mxu0 0.0
    %481 = vmatprep.subr.mxu0 0.0
    %482 = vmatpush2.msra.mxu0 0.0
    %483 = vmatprep.subr.mxu0 0.0
    %484 = vmatpush2.msra.mxu0 0.0
    %485 = vmatprep.mubr.f32.mxu0 0.0
    %486 = vmatmul.mubr.f32.gmra.mxu0 %v419
    %v487 = vpop.f32.mrf.mxu0
    %v488 = vadd.f32 %v416, %v487
    %v489 = vpop.f32.mrf.mxu0
    %490 = vdwg.mxu0
    %491 = vst.msk [vmem:[#allocation2] sm:$0xff] %vm417, %v488
    // Predicated region
    $region14: #{tpu_custom_call.1} parent=1 // pred_check
      _
    $region15: #{tpu_custom_call.1} parent=1 // pred_check_branch
      %493 = sbr.rel (0) target = $region17
    $region16: #{tpu_custom_call.1} parent=1 // pred_region
      %s495 = ssub.s32 128, 128
      %496 = vsyncadd [#allocation3], %s495
      %s498 = sshll.u32 [#allocation2], 4
      %s499 = int_to_ptr.vmem [resolvable:$true] %s498
      %501 = dma.vmem_to_hbm [thread:$0]  %s499, 128, %s3, [#allocation3]
    $region17: #{tpu_custom_call.1} parent=1 // pred_fallthru
      _
    // Predicated region
    $region18: #{tpu_custom_call.1} parent=1 // pred_check
      _
    $region19: #{tpu_custom_call.1} parent=1 // pred_check_branch
      %503 = sbr.rel (0) target = $region21
    $region20: #{tpu_custom_call.1} parent=1 // pred_region
      %504 = dma.done [#allocation3], 128
    $region21: #{tpu_custom_call.1} parent=1 // pred_fallthru
      _
    %505 = vsyncpa [#allocation3], 1

</llo_original>
